<compile_context>
chip_gen: v5e
topology: v5e:2x2
jax: 0.10.0
libtpu: 0.0.40
codegen_flags: <defaults>
</compile_context>

<pallas_src>
import jax
import jax.numpy as jnp
from jax import lax
from jax.experimental import pallas as pl
from jax.experimental.pallas import tpu as pltpu

LN_EPS = 1e-5


def _round_up(x, m):
    return ((x + m - 1) // m) * m


def _device_caps():
    """(vmem_limit_bytes, tile_budget_bytes, tm_max, megacore) for this chip."""
    vmem_phys = 64 * 1024 * 1024            # conservative fallback (v7x)
    try:
        info = pltpu.get_tpu_info()
        vmem_phys = int(getattr(info, "vmem_capacity_bytes", vmem_phys))
    except Exception:
        pass
    megacore = False
    try:
        kind = jax.devices()[0].device_kind.lower()
        megacore = any(t in kind for t in ("v7", "v4", "v5p"))
    except Exception:
        pass
    vmem_limit = min(vmem_phys * 3 // 4, 112 * 1024 * 1024)
    tile_budget = vmem_phys // 2
    tm_max = 2048 if vmem_phys >= 96 * 1024 * 1024 else 1024
    return vmem_limit, tile_budget, tm_max, megacore


def _choose_tm(n, c_s, io_bytes, tile_budget, tm_max, megacore):
    """Row-tile size: as large as the VMEM budget allows; multiple of 8 (or the
    full row count); megacore chips prefer >=2 and even grid step counts."""
    resident = 3 * c_s * c_s * 2 + 8 * c_s * 4                # single-buffered
    per_row = c_s * (2 * io_bytes * 2 + 3 * 4 + 2 * 2)        # dbl-buf io + temps
    cap = max(8, (tile_budget - resident) // per_row)
    cap = min(cap, tm_max)
    cap = (cap // 256) * 256 if cap >= 256 else max(8, (cap // 8) * 8)
    tm = cap
    if megacore and n >= 16:
        tm = min(tm, _round_up(pl.cdiv(n, 2), 8))             # keep both TCs busy
    if n <= tm:
        return int(n)                                         # one full-dim tile
    steps = pl.cdiv(n, tm)
    if steps % 2 == 1:                                        # even step count
        alt = _round_up(pl.cdiv(n, steps + 1), 8)
        if 8 <= alt <= tm and pl.cdiv(n, alt) % 2 == 0:
            tm = alt
    return int(tm)


def _single_transition_kernel(s_ref, w1_ref, w2_ref, w3_ref, vec_ref, o_ref):
    # s_ref: (tm, C) f32/bf16   w*_ref: (C, C) bf16 (pre-transposed)
    # vec_ref: (8, C) f32 packed [b1, b2, b3, gamma, beta, 0, 0, 0]
    s_in = s_ref[...]
    s = s_in.astype(jnp.float32)

    vecs = vec_ref[...]
    b1 = vecs[0:1, :]
    b2 = vecs[1:2, :]
    b3 = vecs[2:3, :]
    gamma = vecs[3:4, :]
    beta = vecs[4:5, :]

    # Three linears on the MXU: bf16 operands, f32 accumulation.
    x = jnp.dot(s_in.astype(jnp.bfloat16), w1_ref[...],
                preferred_element_type=jnp.float32) + b1
    x = jnp.maximum(x, 0.0)
    x = jnp.dot(x.astype(jnp.bfloat16), w2_ref[...],
                preferred_element_type=jnp.float32) + b2
    x = jnp.maximum(x, 0.0)
    x = jnp.dot(x.astype(jnp.bfloat16), w3_ref[...],
                preferred_element_type=jnp.float32) + b3

    # Residual + LayerNorm in f32; single-pass statistics (sum, sum of squares).
    s = s + x
    inv_c = jnp.float32(1.0 / s.shape[-1])
    mean = jnp.sum(s, axis=-1, keepdims=True) * inv_c
    mean_sq = jnp.sum(s * s, axis=-1, keepdims=True) * inv_c
    var = jnp.maximum(mean_sq - mean * mean, 0.0)
    out = (s - mean) * lax.rsqrt(var + LN_EPS) * gamma + beta

    o_ref[...] = out.astype(o_ref.dtype)


def prepare_params(params):
    """One-time preprocessing (hoisted out of the per-call path):
    transposed bf16 weights + one (8, c_s) packed bias/LN block."""
    c_s = params["w1"].shape[0]
    vec = jnp.stack(
        [
            params["b1"].astype(jnp.float32),
            params["b2"].astype(jnp.float32),
            params["b3"].astype(jnp.float32),
            params["ln_weight"].astype(jnp.float32),
            params["ln_bias"].astype(jnp.float32),
            jnp.zeros((c_s,), jnp.float32),
            jnp.zeros((c_s,), jnp.float32),
            jnp.zeros((c_s,), jnp.float32),
        ],
        axis=0,
    )
    return {
        "w1t": jnp.asarray(params["w1"]).T.astype(jnp.bfloat16),
        "w2t": jnp.asarray(params["w2"]).T.astype(jnp.bfloat16),
        "w3t": jnp.asarray(params["w3"]).T.astype(jnp.bfloat16),
        "vec": vec,
    }


@jax.jit
def single_transition(s, prepared):
    """s: [batch, seq, c_s] (f32 or bf16). Returns same shape/dtype."""
    batch, seq, c_s = s.shape
    n = batch * seq
    s2d = s.reshape(n, c_s)
    io_bytes = jnp.dtype(s.dtype).itemsize

    vmem_limit, tile_budget, tm_max, megacore = _device_caps()
    tm = _choose_tm(n, c_s, io_bytes, tile_budget, tm_max, megacore)
    grid = (pl.cdiv(n, tm),)

    row_spec = pl.BlockSpec((tm, c_s), lambda i: (i, 0))
    wmat_spec = pl.BlockSpec((c_s, c_s), lambda i: (0, 0),
                             pipeline_mode=pl.Buffered(buffer_count=1))
    vec_spec = pl.BlockSpec((8, c_s), lambda i: (0, 0),
                            pipeline_mode=pl.Buffered(buffer_count=1))

    cost = pl.CostEstimate(
        flops=2 * 3 * n * c_s * c_s + 12 * n * c_s,
        transcendentals=n,
        bytes_accessed=2 * n * c_s * io_bytes + 3 * c_s * c_s * 2 + 8 * c_s * 4,
    )

    out2d = pl.pallas_call(
        _single_transition_kernel,
        out_shape=jax.ShapeDtypeStruct((n, c_s), s.dtype),
        grid_spec=pltpu.PrefetchScalarGridSpec(
            num_scalar_prefetch=0,
            grid=grid,
            in_specs=[
                row_spec,    # s tile
                wmat_spec,   # w1^T (bf16, resident, single-buffered)
                wmat_spec,   # w2^T
                wmat_spec,   # w3^T
                vec_spec,    # packed b1,b2,b3,gamma,beta
            ],
            out_specs=row_spec,
        ),
        compiler_params=pltpu.CompilerParams(
            dimension_semantics=("parallel",),
            vmem_limit_bytes=vmem_limit,
        ),
        cost_estimate=cost,
    )(s2d, prepared["w1t"], prepared["w2t"], prepared["w3t"], prepared["vec"])

    return out2d.reshape(batch, seq, c_s)


def _reference(s, params):
    """Pure-JAX f32 reference matching the PyTorch _forward_eager + LayerNorm."""
    x = s @ params["w1"].T + params["b1"]
    x = jnp.maximum(x, 0.0)
    x = x @ params["w2"].T + params["b2"]
    x = jnp.maximum(x, 0.0)
    x = x @ params["w3"].T + params["b3"]
    s = s + x
    mean = jnp.mean(s, axis=-1, keepdims=True)
    var = jnp.mean((s - mean) ** 2, axis=-1, keepdims=True)
    s_hat = (s - mean) / jnp.sqrt(var + LN_EPS)
    return s_hat * params["ln_weight"] + params["ln_bias"]


def _init_params(key, c_s):
    ks = jax.random.split(key, 6)
    scale = (2.0 / c_s) ** 0.5
    return {
        "w1": jax.random.normal(ks[0], (c_s, c_s), jnp.float32) * scale,
        "b1": 0.05 * jax.random.normal(ks[5], (c_s,), jnp.float32),
        "w2": jax.random.normal(ks[1], (c_s, c_s), jnp.float32) * scale,
        "b2": jnp.zeros((c_s,), jnp.float32),
        "w3": jax.random.normal(ks[2], (c_s, c_s), jnp.float32) * 0.02,
        "b3": jnp.zeros((c_s,), jnp.float32),
        "ln_weight": jnp.ones((c_s,), jnp.float32)
        + 0.1 * jax.random.normal(ks[3], (c_s,), jnp.float32),
        "ln_bias": 0.1 * jax.random.normal(ks[4], (c_s,), jnp.float32),
    }


if __name__ == "__main__":
    key = jax.random.PRNGKey(0)
    k_param, k_s1, k_s2 = jax.random.split(key, 3)

    # Small, lane-dense demo shapes (real AF c_s=384 is also a multiple of 128).
    c_s = 128
    params = _init_params(k_param, c_s)
    prepared = prepare_params(params)   # one-time weight preprocessing

    # Case 1: batch=2, seq=8 -> n=16 (evenly tiled).
    s1 = jax.random.normal(k_s1, (2, 8, c_s), jnp.float32)
    out1 = jax.block_until_ready(single_transition(s1, prepared))
    ref1 = _reference(s1, params)
    assert out1.shape == s1.shape and out1.dtype == s1.dtype
    # bf16 matmul operands with f32 accumulation vs pure-f32 reference.
    assert jnp.allclose(out1, ref1, atol=2e-2, rtol=2e-2), "mismatch (case 1)"

    # Case 2: batch=3, seq=7 -> n=21 (non-multiple-of-8 rows: exercises the
    # full-dim single tile / ragged tail block path with no padding).
    s2 = jax.random.normal(k_s2, (3, 7, c_s), jnp.float32)
    out2 = jax.block_until_ready(single_transition(s2, prepared))
    ref2 = _reference(s2, params)
    assert out2.shape == s2.shape and out2.dtype == s2.dtype
    assert jnp.allclose(out2, ref2, atol=2e-2, rtol=2e-2), "mismatch (case 2)"

    print("KERNEL_OK")
</pallas_src>

<mosaic_0001>
module attributes {stable_mosaic.version = 11 : i64} {
  func.func @_single_transition_kernel(%arg0: i32, %arg1: memref<16x128xf32, #tpu.memory_space<vmem>>, %arg2: memref<128x128xbf16, #tpu.memory_space<vmem>>, %arg3: memref<128x128xbf16, #tpu.memory_space<vmem>>, %arg4: memref<128x128xbf16, #tpu.memory_space<vmem>>, %arg5: memref<8x128xf32, #tpu.memory_space<vmem>>, %arg6: memref<16x128xf32, #tpu.memory_space<vmem>>) attributes {dimension_semantics = [#tpu.dimension_semantics<parallel>], iteration_bounds = array<i64: 1>, scalar_prefetch = 0 : i64, scratch_operands = 0 : i64, tpu.core_type = #tpu.core_type<tc>, window_params = [{transform_indices = @transform_0, window_bounds = array<i64: 16, 128>}, {pipeline_mode = #tpu.pipeline_mode<synchronous>, transform_indices = @transform_1, window_bounds = array<i64: 128, 128>}, {pipeline_mode = #tpu.pipeline_mode<synchronous>, transform_indices = @transform_2, window_bounds = array<i64: 128, 128>}, {pipeline_mode = #tpu.pipeline_mode<synchronous>, transform_indices = @transform_3, window_bounds = array<i64: 128, 128>}, {pipeline_mode = #tpu.pipeline_mode<synchronous>, transform_indices = @transform_4, window_bounds = array<i64: 8, 128>}, {transform_indices = @transform_5, window_bounds = array<i64: 16, 128>}]} {
    %c0 = arith.constant 0 : index
    %c0_0 = arith.constant 0 : index
    %0 = vector.load %arg1[%c0, %c0_0] : memref<16x128xf32, #tpu.memory_space<vmem>>, vector<16x128xf32>
    %c0_1 = arith.constant 0 : index
    %c0_2 = arith.constant 0 : index
    %1 = vector.load %arg5[%c0_1, %c0_2] : memref<8x128xf32, #tpu.memory_space<vmem>>, vector<8x128xf32>
    %2 = vector.extract_strided_slice %1 {offsets = [0, 0], sizes = [1, 128], strides = [1, 1]} : vector<8x128xf32> to vector<1x128xf32>
    %3 = vector.extract_strided_slice %1 {offsets = [1, 0], sizes = [1, 128], strides = [1, 1]} : vector<8x128xf32> to vector<1x128xf32>
    %4 = vector.extract_strided_slice %1 {offsets = [2, 0], sizes = [1, 128], strides = [1, 1]} : vector<8x128xf32> to vector<1x128xf32>
    %5 = vector.extract_strided_slice %1 {offsets = [3, 0], sizes = [1, 128], strides = [1, 1]} : vector<8x128xf32> to vector<1x128xf32>
    %6 = vector.extract_strided_slice %1 {offsets = [4, 0], sizes = [1, 128], strides = [1, 1]} : vector<8x128xf32> to vector<1x128xf32>
    %7 = arith.truncf %0 : vector<16x128xf32> to vector<16x128xbf16>
    %c0_3 = arith.constant 0 : index
    %c0_4 = arith.constant 0 : index
    %8 = vector.load %arg2[%c0_3, %c0_4] : memref<128x128xbf16, #tpu.memory_space<vmem>>, vector<128x128xbf16>
    %cst = arith.constant dense<0.000000e+00> : vector<16x128xf32>
    %9 = tpu.matmul %7, %8, %cst {dimension_numbers = #tpu.dot_dimension_numbers<[1], [0], [0], [1], [0, 0, 1, 1], [], []>} : vector<16x128xbf16>, vector<128x128xbf16>, vector<16x128xf32> -> vector<16x128xf32>
    %10 = vector.broadcast %2 : vector<1x128xf32> to vector<16x128xf32>
    %11 = arith.addf %9, %10 : vector<16x128xf32>
    %cst_5 = arith.constant 0.000000e+00 : f32
    %12 = vector.broadcast %cst_5 : f32 to vector<16x128xf32>
    %13 = arith.maximumf %11, %12 : vector<16x128xf32>
    %14 = arith.truncf %13 : vector<16x128xf32> to vector<16x128xbf16>
    %c0_6 = arith.constant 0 : index
    %c0_7 = arith.constant 0 : index
    %15 = vector.load %arg3[%c0_6, %c0_7] : memref<128x128xbf16, #tpu.memory_space<vmem>>, vector<128x128xbf16>
    %cst_8 = arith.constant dense<0.000000e+00> : vector<16x128xf32>
    %16 = tpu.matmul %14, %15, %cst_8 {dimension_numbers = #tpu.dot_dimension_numbers<[1], [0], [0], [1], [0, 0, 1, 1], [], []>} : vector<16x128xbf16>, vector<128x128xbf16>, vector<16x128xf32> -> vector<16x128xf32>
    %17 = vector.broadcast %3 : vector<1x128xf32> to vector<16x128xf32>
    %18 = arith.addf %16, %17 : vector<16x128xf32>
    %cst_9 = arith.constant 0.000000e+00 : f32
    %19 = vector.broadcast %cst_9 : f32 to vector<16x128xf32>
    %20 = arith.maximumf %18, %19 : vector<16x128xf32>
    %21 = arith.truncf %20 : vector<16x128xf32> to vector<16x128xbf16>
    %c0_10 = arith.constant 0 : index
    %c0_11 = arith.constant 0 : index
    %22 = vector.load %arg4[%c0_10, %c0_11] : memref<128x128xbf16, #tpu.memory_space<vmem>>, vector<128x128xbf16>
    %cst_12 = arith.constant dense<0.000000e+00> : vector<16x128xf32>
    %23 = tpu.matmul %21, %22, %cst_12 {dimension_numbers = #tpu.dot_dimension_numbers<[1], [0], [0], [1], [0, 0, 1, 1], [], []>} : vector<16x128xbf16>, vector<128x128xbf16>, vector<16x128xf32> -> vector<16x128xf32>
    %24 = vector.broadcast %4 : vector<1x128xf32> to vector<16x128xf32>
    %25 = arith.addf %23, %24 : vector<16x128xf32>
    %26 = arith.addf %0, %25 : vector<16x128xf32>
    %cst_13 = arith.constant dense<0.000000e+00> : vector<16xf32>
    %27 = vector.multi_reduction <add>, %26, %cst_13 [1] : vector<16x128xf32> to vector<16xf32>
    %28 = vector.shape_cast %27 : vector<16xf32> to vector<16x1xf32>
    %cst_14 = arith.constant 7.812500e-03 : f32
    %29 = vector.broadcast %cst_14 : f32 to vector<16x1xf32>
    %30 = arith.mulf %28, %29 : vector<16x1xf32>
    %31 = arith.mulf %26, %26 : vector<16x128xf32>
    %cst_15 = arith.constant dense<0.000000e+00> : vector<16xf32>
    %32 = vector.multi_reduction <add>, %31, %cst_15 [1] : vector<16x128xf32> to vector<16xf32>
    %33 = vector.shape_cast %32 : vector<16xf32> to vector<16x1xf32>
    %cst_16 = arith.constant 7.812500e-03 : f32
    %34 = vector.broadcast %cst_16 : f32 to vector<16x1xf32>
    %35 = arith.mulf %33, %34 : vector<16x1xf32>
    %36 = arith.mulf %30, %30 : vector<16x1xf32>
    %37 = arith.subf %35, %36 : vector<16x1xf32>
    %cst_17 = arith.constant 0.000000e+00 : f32
    %38 = vector.broadcast %cst_17 : f32 to vector<16x1xf32>
    %39 = arith.maximumf %37, %38 : vector<16x1xf32>
    %40 = vector.broadcast %30 : vector<16x1xf32> to vector<16x128xf32>
    %41 = arith.subf %26, %40 : vector<16x128xf32>
    %cst_18 = arith.constant 9.99999974E-6 : f32
    %42 = vector.broadcast %cst_18 : f32 to vector<16x1xf32>
    %43 = arith.addf %39, %42 : vector<16x1xf32>
    %44 = math.rsqrt %43 : vector<16x1xf32>
    %45 = vector.broadcast %44 : vector<16x1xf32> to vector<16x128xf32>
    %46 = arith.mulf %41, %45 : vector<16x128xf32>
    %47 = vector.broadcast %5 : vector<1x128xf32> to vector<16x128xf32>
    %48 = arith.mulf %46, %47 : vector<16x128xf32>
    %49 = vector.broadcast %6 : vector<1x128xf32> to vector<16x128xf32>
    %50 = arith.addf %48, %49 : vector<16x128xf32>
    %c0_19 = arith.constant 0 : index
    %c0_20 = arith.constant 0 : index
    %51 = vector.load %arg6[%c0_19, %c0_20] : memref<16x128xf32, #tpu.memory_space<vmem>>, vector<16x128xf32>
    tpu.vector_store %arg6[%c0_19, %c0_20], %50 {strides = array<i32>} : memref<16x128xf32, #tpu.memory_space<vmem>>, vector<16x128xf32>,
    return
  }
  func.func @transform_0(%arg0: i32) -> (i32, i32) {
    %c0_i32 = arith.constant 0 : i32
    %c0_i32_0 = arith.constant 0 : i32
    return %arg0, %c0_i32 : i32, i32
  }
  func.func @transform_1(%arg0: i32) -> (i32, i32) {
    %c0_i32 = arith.constant 0 : i32
    %c0_i32_0 = arith.constant 0 : i32
    %c0_i32_1 = arith.constant 0 : i32
    return %c0_i32, %c0_i32_0 : i32, i32
  }
  func.func @transform_2(%arg0: i32) -> (i32, i32) {
    %c0_i32 = arith.constant 0 : i32
    %c0_i32_0 = arith.constant 0 : i32
    %c0_i32_1 = arith.constant 0 : i32
    return %c0_i32, %c0_i32_0 : i32, i32
  }
  func.func @transform_3(%arg0: i32) -> (i32, i32) {
    %c0_i32 = arith.constant 0 : i32
    %c0_i32_0 = arith.constant 0 : i32
    %c0_i32_1 = arith.constant 0 : i32
    return %c0_i32, %c0_i32_0 : i32, i32
  }
  func.func @transform_4(%arg0: i32) -> (i32, i32) {
    %c0_i32 = arith.constant 0 : i32
    %c0_i32_0 = arith.constant 0 : i32
    %c0_i32_1 = arith.constant 0 : i32
    return %c0_i32, %c0_i32_0 : i32, i32
  }
  func.func @transform_5(%arg0: i32) -> (i32, i32) {
    %c0_i32 = arith.constant 0 : i32
    %c0_i32_0 = arith.constant 0 : i32
    return %arg0, %c0_i32 : i32, i32
  }
}

</mosaic_0001>

<llo_original>
// kernel: single_transition.1
$region0: #{single_transition.1}
  #allocation0 [shape = 'u32[]', space=smem, size = 0x4, offset = 0x4, fixed_abs, tag = 'smem constant byte address 0x4 - core index']
  #allocation1 [shape = 'u32[72,128]{1,0:T(1,128)}', space=vmem, size = 0x9000, scoped, tag = 'internal scratch']
  %s0 = inlined_call_operand.hbm [shape: f32[16,128], index: 0, kind: input, shape index: {}]
  %s1 = inlined_call_operand.hbm [shape: bf16[128,128], index: 1, kind: input, shape index: {}]
  %s2 = inlined_call_operand.hbm [shape: bf16[128,128], index: 2, kind: input, shape index: {}]
  %s3 = inlined_call_operand.hbm [shape: bf16[128,128], index: 3, kind: input, shape index: {}]
  %s4 = inlined_call_operand.hbm [shape: f32[8,128], index: 4, kind: input, shape index: {}]
  %s5 = inlined_call_operand.hbm [shape: f32[16,128], index: 5, kind: output, shape index: {}]
  %s6 = sld [smem:[#allocation0]]
  $region50: #{single_transition.1} parent=0
    _
  %s8 = ssub.s32 1, %s6
  %s9 = scalar_select 0, %s8, %s6
  $region1: #{single_transition.1} parent=0
    #allocation2 [shape = 'u8[8192]{0}', space=vmem, size = 0x2000, scoped, tag = 'input window, operand 0, single buffered']
    #allocation3 [shape = 's32[1]{0}', space=sflag, size = 0x4, scoped, tag = 'scoped memory for single_transition.1']
    #allocation4 [shape = 's32[1]{0}', space=sflag, size = 0x4, scoped, tag = 'scoped memory for single_transition.1']
    #allocation5 [shape = 'u8[32768]{0}', space=vmem, size = 0x8000, scoped, tag = 'input window, operand 1, single buffered']
    #allocation6 [shape = 's32[1]{0}', space=sflag, size = 0x4, scoped, tag = 'scoped memory for single_transition.1']
    #allocation7 [shape = 'u8[32768]{0}', space=vmem, size = 0x8000, scoped, tag = 'input window, operand 2, single buffered']
    #allocation8 [shape = 'u8[32768]{0}', space=vmem, size = 0x8000, scoped, tag = 'input window, operand 3, single buffered']
    #allocation9 [shape = 's32[1]{0}', space=sflag, size = 0x4, scoped, tag = 'scoped memory for single_transition.1']
    #allocation10 [shape = 'u8[4096]{0}', space=vmem, size = 0x1000, scoped, tag = 'input window, operand 4, single buffered']
    #allocation11 [shape = 'u8[8192]{0}', space=vmem, size = 0x2000, scoped, tag = 'output window, operand 0, single buffered']
    %10 = vsyncpa [#allocation3], 0
    %11 = vsyncpa [#allocation6], 0
    %12 = vsyncpa [#allocation9], 0
    %13 = vsyncpa [#allocation4], 0
    // Predicated region
    $region2: #{single_transition.1} parent=1 // pred_check
      _
    $region3: #{single_transition.1} parent=1 // pred_check_branch
      %15 = sbr.rel (0) target = $region5
    $region4: #{single_transition.1} parent=1 // pred_region
      %17 = vsyncadd [#allocation3], 0
      %s18 = sshll.u32 %s0, 4
      %s19 = int_to_ptr.hbm [resolvable:$true] %s18
      %s20 = sshll.u32 [#allocation2], 4
      %s21 = int_to_ptr.vmem [resolvable:$true] %s20
      %26 = dma.hbm_to_vmem [thread:$0]  %s19, 256, %s21, [#allocation3], 128, 128, 8
    $region5: #{single_transition.1} parent=1 // pred_fallthru
      _
    // Predicated region
    $region6: #{single_transition.1} parent=1 // pred_check
      _
    $region7: #{single_transition.1} parent=1 // pred_check_branch
      %28 = sbr.rel (0) target = $region9
    $region8: #{single_transition.1} parent=1 // pred_region
      %30 = vsyncadd [#allocation6], 0
      %s31 = sshll.u32 %s1, 4
      %s32 = int_to_ptr.hbm [resolvable:$true] %s31
      %s33 = sshll.u32 [#allocation5], 4
      %s34 = int_to_ptr.vmem [resolvable:$true] %s33
      %39 = dma.hbm_to_vmem [thread:$0]  %s32, 1024, %s34, [#allocation6], 64, 64, 4
    $region9: #{single_transition.1} parent=1 // pred_fallthru
      _
    // Predicated region
    $region10: #{single_transition.1} parent=1 // pred_check
      _
    $region11: #{single_transition.1} parent=1 // pred_check_branch
      %41 = sbr.rel (0) target = $region13
    $region12: #{single_transition.1} parent=1 // pred_region
      %43 = vsyncadd [#allocation6], 0
      %s44 = sshll.u32 %s2, 4
      %s45 = int_to_ptr.hbm [resolvable:$true] %s44
      %s46 = sshll.u32 [#allocation7], 4
      %s47 = int_to_ptr.vmem [resolvable:$true] %s46
      %52 = dma.hbm_to_vmem [thread:$0]  %s45, 1024, %s47, [#allocation6], 64, 64, 4
    $region13: #{single_transition.1} parent=1 // pred_fallthru
      _
    // Predicated region
    $region14: #{single_transition.1} parent=1 // pred_check
      _
    $region15: #{single_transition.1} parent=1 // pred_check_branch
      %54 = sbr.rel (0) target = $region17
    $region16: #{single_transition.1} parent=1 // pred_region
      %56 = vsyncadd [#allocation9], 0
      %s57 = sshll.u32 %s3, 4
      %s58 = int_to_ptr.hbm [resolvable:$true] %s57
      %s59 = sshll.u32 [#allocation8], 4
      %s60 = int_to_ptr.vmem [resolvable:$true] %s59
      %65 = dma.hbm_to_vmem [thread:$0]  %s58, 1024, %s60, [#allocation9], 64, 64, 4
    $region17: #{single_transition.1} parent=1 // pred_fallthru
      _
    // Predicated region
    $region18: #{single_transition.1} parent=1 // pred_check
      _
    $region19: #{single_transition.1} parent=1 // pred_check_branch
      %67 = sbr.rel (0) target = $region21
    $region20: #{single_transition.1} parent=1 // pred_region
      %69 = vsyncadd [#allocation9], 0
      %s71 = sshll.u32 %s4, 4
      %s72 = int_to_ptr.hbm [resolvable:$true] %s71
      %s73 = sshll.u32 [#allocation10], 4
      %s74 = int_to_ptr.vmem [resolvable:$true] %s73
      %76 = dma.hbm_to_vmem [thread:$0]  %s72, 128, %s74, [#allocation9]
    $region21: #{single_transition.1} parent=1 // pred_fallthru
      _
    // Predicated region
    $region22: #{single_transition.1} parent=1 // pred_check
      _
    $region23: #{single_transition.1} parent=1 // pred_check_branch
      %78 = sbr.rel (0) target = $region25
    $region24: #{single_transition.1} parent=1 // pred_region
      %80 = dma.done [#allocation3], 256
    $region25: #{single_transition.1} parent=1 // pred_fallthru
      _
    // Predicated region
    $region26: #{single_transition.1} parent=1 // pred_check
      _
    $region27: #{single_transition.1} parent=1 // pred_check_branch
      %82 = sbr.rel (0) target = $region29
    $region28: #{single_transition.1} parent=1 // pred_region
      %84 = dma.done [#allocation6], 1024
    $region29: #{single_transition.1} parent=1 // pred_fallthru
      _
    // Predicated region
    $region30: #{single_transition.1} parent=1 // pred_check
      _
    $region31: #{single_transition.1} parent=1 // pred_check_branch
      %86 = sbr.rel (0) target = $region33
    $region32: #{single_transition.1} parent=1 // pred_region
      %88 = dma.done [#allocation6], 1024
    $region33: #{single_transition.1} parent=1 // pred_fallthru
      _
    // Predicated region
    $region34: #{single_transition.1} parent=1 // pred_check
      _
    $region35: #{single_transition.1} parent=1 // pred_check_branch
      %90 = sbr.rel (0) target = $region37
    $region36: #{single_transition.1} parent=1 // pred_region
      %92 = dma.done [#allocation9], 1024
    $region37: #{single_transition.1} parent=1 // pred_fallthru
      _
    // Predicated region
    $region38: #{single_transition.1} parent=1 // pred_check
      _
    $region39: #{single_transition.1} parent=1 // pred_check_branch
      %94 = sbr.rel (0) target = $region41
    $region40: #{single_transition.1} parent=1 // pred_region
      %96 = dma.done [#allocation9], 128
    $region41: #{single_transition.1} parent=1 // pred_fallthru
      _
    %v97 = vld [vmem:[#allocation2] sm:$0xff]
    %v98 = vld [vmem:[#allocation2 + $0x8] sm:$0xff]
    %v99 = vld [vmem:[#allocation10] sm:$0xff]
    %v100 = vpack.c.bf16 %v98, %v97
    %v101 = vld [vmem:[#allocation5] sm:$0xf]
    %v102 = vld [vmem:[#allocation5 + $0x4] sm:$0xf]
    %v103 = vld [vmem:[#allocation5 + $0x8] sm:$0xf]
    %v104 = vld [vmem:[#allocation5 + $0xc] sm:$0xf]
    %v105 = vld [vmem:[#allocation5 + $0x10] sm:$0xf]
    %v106 = vld [vmem:[#allocation5 + $0x14] sm:$0xf]
    %v107 = vld [vmem:[#allocation5 + $0x18] sm:$0xf]
    %v108 = vld [vmem:[#allocation5 + $0x1c] sm:$0xf]
    %v109 = vld [vmem:[#allocation5 + $0x20] sm:$0xf]
    %v110 = vld [vmem:[#allocation5 + $0x24] sm:$0xf]
    %v111 = vld [vmem:[#allocation5 + $0x28] sm:$0xf]
    %v112 = vld [vmem:[#allocation5 + $0x2c] sm:$0xf]
    %v113 = vld [vmem:[#allocation5 + $0x30] sm:$0xf]
    %v114 = vld [vmem:[#allocation5 + $0x34] sm:$0xf]
    %v115 = vld [vmem:[#allocation5 + $0x38] sm:$0xf]
    %v116 = vld [vmem:[#allocation5 + $0x3c] sm:$0xf]
    %v117 = vperm.slane %v99, 0
    %v134 = vunpack.c.l.b16 %v101
    %v135 = vunpack.c.l.b16 %v102
    %v136 = vunpack.c.l.b16 %v103
    %v137 = vunpack.c.l.b16 %v104
    %v138 = vunpack.c.l.b16 %v105
    %v139 = vunpack.c.l.b16 %v106
    %v140 = vunpack.c.l.b16 %v107
    %v141 = vunpack.c.l.b16 %v108
    %v142 = vunpack.c.l.b16 %v109
    %v143 = vunpack.c.l.b16 %v110
    %v144 = vunpack.c.l.b16 %v111
    %v145 = vunpack.c.l.b16 %v112
    %v146 = vunpack.c.l.b16 %v113
    %v147 = vunpack.c.l.b16 %v114
    %v148 = vunpack.c.l.b16 %v115
    %v149 = vunpack.c.l.b16 %v116
    %v150 = vpack.c.b16 %v135, %v134
    %v151 = vpack.c.b16 %v137, %v136
    %v152 = vpack.c.b16 %v139, %v138
    %v153 = vpack.c.b16 %v141, %v140
    %v154 = vpack.c.b16 %v143, %v142
    %v155 = vpack.c.b16 %v145, %v144
    %v156 = vpack.c.b16 %v147, %v146
    %v157 = vpack.c.b16 %v149, %v148
    %166 = vmatpush.bf16.msra.mxu0 %v157
    %167 = vmatpush.bf16.msra.mxu0 %v156
    %168 = vmatpush.bf16.msra.mxu0 %v155
    %169 = vmatpush.bf16.msra.mxu0 %v154
    %170 = vmatpush.bf16.msra.mxu0 %v153
    %171 = vmatpush.bf16.msra.mxu0 %v152
    %172 = vmatpush.bf16.msra.mxu0 %v151
    %173 = vmatpush.bf16.msra.mxu0 %v150
    %174 = vmatmul.bf16.gmra.mxu0 %v100
    %v175 = vpop.f32.mrf.mxu0
    %v176 = vadd.f32 %v117, %v175
    %v177 = vpop.f32.mrf.mxu0
    %v178 = vadd.f32 %v117, %v177
    %179 = vdwg.mxu0
    %v180 = vmax.f32 %v176, 0.0
    %v181 = vmax.f32 %v178, 0.0
    %v182 = vpack.c.bf16 %v181, %v180
    %v183 = vld [vmem:[#allocation7] sm:$0xf]
    %v184 = vld [vmem:[#allocation7 + $0x4] sm:$0xf]
    %v185 = vld [vmem:[#allocation7 + $0x8] sm:$0xf]
    %v186 = vld [vmem:[#allocation7 + $0xc] sm:$0xf]
    %v187 = vld [vmem:[#allocation7 + $0x10] sm:$0xf]
    %v188 = vld [vmem:[#allocation7 + $0x14] sm:$0xf]
    %v189 = vld [vmem:[#allocation7 + $0x18] sm:$0xf]
    %v190 = vld [vmem:[#allocation7 + $0x1c] sm:$0xf]
    %v191 = vld [vmem:[#allocation7 + $0x20] sm:$0xf]
    %v192 = vld [vmem:[#allocation7 + $0x24] sm:$0xf]
    %v193 = vld [vmem:[#allocation7 + $0x28] sm:$0xf]
    %v194 = vld [vmem:[#allocation7 + $0x2c] sm:$0xf]
    %v195 = vld [vmem:[#allocation7 + $0x30] sm:$0xf]
    %v196 = vld [vmem:[#allocation7 + $0x34] sm:$0xf]
    %v197 = vld [vmem:[#allocation7 + $0x38] sm:$0xf]
    %v198 = vld [vmem:[#allocation7 + $0x3c] sm:$0xf]
    %v199 = vperm.slane %v99, 1
    %v216 = vunpack.c.l.b16 %v183
    %v217 = vunpack.c.l.b16 %v184
    %v218 = vunpack.c.l.b16 %v185
    %v219 = vunpack.c.l.b16 %v186
    %v220 = vunpack.c.l.b16 %v187
    %v221 = vunpack.c.l.b16 %v188
    %v222 = vunpack.c.l.b16 %v189
    %v223 = vunpack.c.l.b16 %v190
    %v224 = vunpack.c.l.b16 %v191
    %v225 = vunpack.c.l.b16 %v192
    %v226 = vunpack.c.l.b16 %v193
    %v227 = vunpack.c.l.b16 %v194
    %v228 = vunpack.c.l.b16 %v195
    %v229 = vunpack.c.l.b16 %v196
    %v230 = vunpack.c.l.b16 %v197
    %v231 = vunpack.c.l.b16 %v198
    %v232 = vpack.c.b16 %v217, %v216
    %v233 = vpack.c.b16 %v219, %v218
    %v234 = vpack.c.b16 %v221, %v220
    %v235 = vpack.c.b16 %v223, %v222
    %v236 = vpack.c.b16 %v225, %v224
    %v237 = vpack.c.b16 %v227, %v226
    %v238 = vpack.c.b16 %v229, %v228
    %v239 = vpack.c.b16 %v231, %v230
    %248 = vmatpush.bf16.msra.mxu0 %v239
    %249 = vmatpush.bf16.msra.mxu0 %v238
    %250 = vmatpush.bf16.msra.mxu0 %v237
    %251 = vmatpush.bf16.msra.mxu0 %v236
    %252 = vmatpush.bf16.msra.mxu0 %v235
    %253 = vmatpush.bf16.msra.mxu0 %v234
    %254 = vmatpush.bf16.msra.mxu0 %v233
    %255 = vmatpush.bf16.msra.mxu0 %v232
    %256 = vmatmul.bf16.gmra.mxu0 %v182
    %v257 = vpop.f32.mrf.mxu0
    %v258 = vadd.f32 %v199, %v257
    %v259 = vpop.f32.mrf.mxu0
    %v260 = vadd.f32 %v199, %v259
    %261 = vdwg.mxu0
    %v262 = vmax.f32 %v258, 0.0
    %v263 = vmax.f32 %v260, 0.0
    %v264 = vpack.c.bf16 %v263, %v262
    %v265 = vld [vmem:[#allocation8] sm:$0xf]
    %v266 = vld [vmem:[#allocation8 + $0x4] sm:$0xf]
    %v267 = vld [vmem:[#allocation8 + $0x8] sm:$0xf]
    %v268 = vld [vmem:[#allocation8 + $0xc] sm:$0xf]
    %v269 = vld [vmem:[#allocation8 + $0x10] sm:$0xf]
    %v270 = vld [vmem:[#allocation8 + $0x14] sm:$0xf]
    %v271 = vld [vmem:[#allocation8 + $0x18] sm:$0xf]
    %v272 = vld [vmem:[#allocation8 + $0x1c] sm:$0xf]
    %v273 = vld [vmem:[#allocation8 + $0x20] sm:$0xf]
    %v274 = vld [vmem:[#allocation8 + $0x24] sm:$0xf]
    %v275 = vld [vmem:[#allocation8 + $0x28] sm:$0xf]
    %v276 = vld [vmem:[#allocation8 + $0x2c] sm:$0xf]
    %v277 = vld [vmem:[#allocation8 + $0x30] sm:$0xf]
    %v278 = vld [vmem:[#allocation8 + $0x34] sm:$0xf]
    %v279 = vld [vmem:[#allocation8 + $0x38] sm:$0xf]
    %v280 = vld [vmem:[#allocation8 + $0x3c] sm:$0xf]
    %v281 = vperm.slane %v99, 2
    %v298 = vunpack.c.l.b16 %v265
    %v299 = vunpack.c.l.b16 %v266
    %v300 = vunpack.c.l.b16 %v267
    %v301 = vunpack.c.l.b16 %v268
    %v302 = vunpack.c.l.b16 %v269
    %v303 = vunpack.c.l.b16 %v270
    %v304 = vunpack.c.l.b16 %v271
    %v305 = vunpack.c.l.b16 %v272
    %v306 = vunpack.c.l.b16 %v273
    %v307 = vunpack.c.l.b16 %v274
    %v308 = vunpack.c.l.b16 %v275
    %v309 = vunpack.c.l.b16 %v276
    %v310 = vunpack.c.l.b16 %v277
    %v311 = vunpack.c.l.b16 %v278
    %v312 = vunpack.c.l.b16 %v279
    %v313 = vunpack.c.l.b16 %v280
    %v314 = vpack.c.b16 %v299, %v298
    %v315 = vpack.c.b16 %v301, %v300
    %v316 = vpack.c.b16 %v303, %v302
    %v317 = vpack.c.b16 %v305, %v304
    %v318 = vpack.c.b16 %v307, %v306
    %v319 = vpack.c.b16 %v309, %v308
    %v320 = vpack.c.b16 %v311, %v310
    %v321 = vpack.c.b16 %v313, %v312
    %330 = vmatpush.bf16.msra.mxu0 %v321
    %331 = vmatpush.bf16.msra.mxu0 %v320
    %332 = vmatpush.bf16.msra.mxu0 %v319
    %333 = vmatpush.bf16.msra.mxu0 %v318
    %334 = vmatpush.bf16.msra.mxu0 %v317
    %335 = vmatpush.bf16.msra.mxu0 %v316
    %336 = vmatpush.bf16.msra.mxu0 %v315
    %337 = vmatpush.bf16.msra.mxu0 %v314
    %338 = vmatmul.bf16.gmra.mxu0 %v264
    %v339 = vpop.f32.mrf.mxu0
    %v340 = vadd.f32 %v281, %v339
    %v341 = vpop.f32.mrf.mxu0
    %v342 = vadd.f32 %v281, %v341
    %343 = vdwg.mxu0
    %v344 = vadd.f32 %v97, %v340
    %v345 = vadd.f32 %v98, %v342
    %346 = vadd.xlane.f32.xlu0 %v344
    %v347 = vpop.xlane.xlu0 %346
    %348 = vadd.xlane.f32.xlu0 %v345
    %v349 = vpop.xlane.xlu0 %348
    %v350 = vmul.f32 %v347, 0.0078125
    %v351 = vmul.f32 %v349, 0.0078125
    %v352 = vmul.f32 %v344, %v344
    %v353 = vmul.f32 %v345, %v345
    %354 = vadd.xlane.f32.xlu0 %v352
    %v355 = vpop.xlane.xlu0 %354
    %356 = vadd.xlane.f32.xlu0 %v353
    %v357 = vpop.xlane.xlu0 %356
    %v358 = vmul.f32 %v355, 0.0078125
    %v359 = vmul.f32 %v357, 0.0078125
    %v360 = vmul.f32 %v350, %v350
    %v361 = vmul.f32 %v351, %v351
    %v362 = vsub.f32 %v358, %v360
    %v363 = vsub.f32 %v359, %v361
    %v364 = vmax.f32 %v362, 0.0
    %v365 = vmax.f32 %v363, 0.0
    %v366 = vsub.f32 %v344, %v350
    %v367 = vsub.f32 %v345, %v351
    %v368 = vadd.f32 %v364, 1e-05
    %v369 = vadd.f32 %v365, 1e-05
    %v370 = vrsqrt.pop %v368
    %v371 = vmul.f32 %v370, %v368
    %v372 = vmul.f32 %v371, %v370
    %v373 = vmul.f32 0.5, %v372
    %v374 = vsub.f32 1.5, %v373
    %v375 = vmul.f32 %v370, %v374
    %vm376 = vweird.f32 %v368
    %vm377 = vweird.f32 %v370
    %vm378 = vmor %vm376, %vm377
    %v379 = vsel %vm378, %v370, %v375
    %v380 = vrsqrt.pop %v369
    %v381 = vmul.f32 %v380, %v369
    %v382 = vmul.f32 %v381, %v380
    %v383 = vmul.f32 0.5, %v382
    %v384 = vsub.f32 1.5, %v383
    %v385 = vmul.f32 %v380, %v384
    %vm386 = vweird.f32 %v369
    %vm387 = vweird.f32 %v380
    %vm388 = vmor %vm386, %vm387
    %v389 = vsel %vm388, %v380, %v385
    %v390 = vmul.f32 %v366, %v379
    %v391 = vmul.f32 %v367, %v389
    %v392 = vperm.slane %v99, 3
    %v393 = vmul.f32 %v390, %v392
    %v394 = vmul.f32 %v391, %v392
    %v395 = vperm.slane %v99, 4
    %v396 = vadd.f32 %v393, %v395
    %v397 = vadd.f32 %v394, %v395
    %398 = vst [vmem:[#allocation11] sm:$0xff] %v396
    %399 = vst [vmem:[#allocation11 + $0x8] sm:$0xff] %v397
    // Predicated region
    $region42: #{single_transition.1} parent=1 // pred_check
      _
    $region43: #{single_transition.1} parent=1 // pred_check_branch
      %401 = sbr.rel (0) target = $region45
    $region44: #{single_transition.1} parent=1 // pred_region
      %403 = vsyncadd [#allocation4], 0
      %s404 = sshll.u32 [#allocation11], 4
      %s405 = int_to_ptr.vmem [resolvable:$true] %s404
      %s406 = sshll.u32 %s5, 4
      %s407 = int_to_ptr.hbm [resolvable:$true] %s406
      %412 = dma.vmem_to_hbm [thread:$0]  %s405, 256, %s407, [#allocation4], 128, 128, 8
    $region45: #{single_transition.1} parent=1 // pred_fallthru
      _
    // Predicated region
    $region46: #{single_transition.1} parent=1 // pred_check
      _
    $region47: #{single_transition.1} parent=1 // pred_check_branch
      %414 = sbr.rel (0) target = $region49
    $region48: #{single_transition.1} parent=1 // pred_region
      %416 = dma.done [#allocation4], 256
    $region49: #{single_transition.1} parent=1 // pred_fallthru
      _
    %417 = vsyncpa [#allocation3], 1
    %418 = vsyncpa [#allocation6], 1
    %419 = vsyncpa [#allocation9], 1
    %420 = vsyncpa [#allocation4], 1

</llo_original>
